<compile_context>
chip_gen: v7x
topology: tpu7x:2x2x1
jax: 0.10.0
libtpu: 0.0.40
codegen_flags: <defaults>
</compile_context>

<pallas_src>
import jax
import jax.numpy as jnp
from jax.experimental import pallas as pl
from jax.experimental.pallas import tpu as pltpu


def _mlp_kernel(x_ref, w1_ref, b1_ref, w2_ref, b2_ref, o_ref):
    # In-kernel bf16 cast of the activation tile (x arrives from HBM as f32 once).
    x = x_ref[...].astype(jnp.bfloat16)
    # Hidden layer: h = relu(x @ W1 + b1); bf16 MXU operands, f32 accumulate.
    h = jnp.dot(x, w1_ref[...], preferred_element_type=jnp.float32)
    h = jnp.maximum(h + b1_ref[...], 0.0)            # (TB, H) + (1, H) broadcast
    # Output layer: y = h @ W2 + b2 (Out stays narrow; no lane padding).
    y = jnp.dot(h.astype(jnp.bfloat16), w2_ref[...],
                preferred_element_type=jnp.float32)
    o_ref[...] = (y + b2_ref[...]).astype(o_ref.dtype)


def prepare_params(w1, b1, w2, b2):
    """One-time parameter preparation (call once at init / after each update).

    Casts weights to bf16 and reshapes biases to (1, F) f32 so the forward
    wrapper does no per-call preprocessing.
    """
    return (
        w1.astype(jnp.bfloat16),                 # (In, H)
        b1.reshape(1, -1).astype(jnp.float32),   # (1, H)
        w2.astype(jnp.bfloat16),                 # (H, Out)
        b2.reshape(1, -1).astype(jnp.float32),   # (1, Out)
    )


def _choose_block_b(B, max_tb=1024):
    """Rows per grid step.

    Tiny batches: a single full block (block == full dim is always legal).
    Otherwise: >= 2 grid steps (so v7x's two TensorCores both get tiles),
    rows a multiple of 16, capped at max_tb (per-step overhead amortized,
    VMEM nowhere near binding even at 2048 rows).
    """
    if B <= 64:
        return B
    half = -(-B // 2)                 # ceil(B / 2)
    tb = -(-half // 16) * 16          # round up to a multiple of 16
    return min(tb, max_tb)


def linear_qnet_forward(x, params, *, block_b=None):
    """Fused forward pass of LinearQnet.

    x      : (B, In) or (In,) float32
    params : tuple from prepare_params() — (w1_bf16 (In,H), b1_f32 (1,H),
                                            w2_bf16 (H,Out), b2_f32 (1,Out))
    returns (B, Out) float32 (or (Out,) for a 1-D input)
    """
    w1_bf, b1_2d, w2_bf, b2_2d = params

    squeeze = x.ndim == 1
    if squeeze:
        x = x[None, :]

    B, In = x.shape
    H = w1_bf.shape[1]
    Out = w2_bf.shape[1]

    TB = block_b if block_b is not None else _choose_block_b(B)
    grid = (pl.cdiv(B, TB),)          # ragged last tile handled by Pallas masking

    cost = pl.CostEstimate(
        flops=2 * B * (In * H + H * Out),
        transcendentals=0,
        bytes_accessed=(B * In * 4 + In * H * 2 + H * 4
                        + H * Out * 2 + Out * 4 + B * Out * 4),
    )

    out = pl.pallas_call(
        _mlp_kernel,
        out_shape=jax.ShapeDtypeStruct((B, Out), jnp.float32),
        grid=grid,
        in_specs=[
            # activations stream per batch tile (f32, cast in-kernel)
            pl.BlockSpec((TB, In), lambda i: (i, 0)),
            # weights / biases: constant index_map -> DMA'd once, VMEM-resident
            pl.BlockSpec((In, H), lambda i: (0, 0)),
            pl.BlockSpec((1, H), lambda i: (0, 0)),
            pl.BlockSpec((H, Out), lambda i: (0, 0)),
            pl.BlockSpec((1, Out), lambda i: (0, 0)),
        ],
        out_specs=pl.BlockSpec((TB, Out), lambda i: (i, 0)),
        compiler_params=pltpu.CompilerParams(
            # batch axis is independent -> shard across both TCs on v7x
            dimension_semantics=("parallel",)
        ),
        cost_estimate=cost,
    )(x, w1_bf, b1_2d, w2_bf, b2_2d)

    return out[0] if squeeze else out


def init_params(key, input_layer, hidden_layer, output_layer):
    """Deterministic f32 params mimicking nn.Linear's U(-1/sqrt(fan_in), ...)."""
    k1, k2, k3, k4 = jax.random.split(key, 4)
    bound1 = 1.0 / jnp.sqrt(input_layer)
    bound2 = 1.0 / jnp.sqrt(hidden_layer)
    # Stored already transposed: (in, out)
    w1 = jax.random.uniform(k1, (input_layer, hidden_layer), jnp.float32,
                            minval=-bound1, maxval=bound1)
    b1 = jax.random.uniform(k2, (hidden_layer,), jnp.float32,
                            minval=-bound1, maxval=bound1)
    w2 = jax.random.uniform(k3, (hidden_layer, output_layer), jnp.float32,
                            minval=-bound2, maxval=bound2)
    b2 = jax.random.uniform(k4, (output_layer,), jnp.float32,
                            minval=-bound2, maxval=bound2)
    return w1, b1, w2, b2


# TODO(synk): LinearQnet.save() is host-side torch checkpoint I/O — no kernel
# equivalent; persist the (w1, b1, w2, b2) arrays with your own serializer.


if __name__ == "__main__":
    # Small Q-net shapes (snake-game style): input=16, hidden=32, output=4.
    # Batch = 256 -> TB = 128, grid of 2 "parallel" tiles (both v7x TCs busy).
    B, IN, HID, OUT = 256, 16, 32, 4

    key = jax.random.PRNGKey(0)
    kx, kp = jax.random.split(key)
    x = jax.random.normal(kx, (B, IN), dtype=jnp.float32)
    w1, b1, w2, b2 = init_params(kp, IN, HID, OUT)

    # One-time preparation (hoisted out of the per-call forward path).
    params = prepare_params(w1, b1, w2, b2)

    y = linear_qnet_forward(x, params)
    jax.block_until_ready(y)
    assert y.shape == (B, OUT)

    # Reference with matching bf16-operand / f32-accumulate math (tight check).
    h_ref = jnp.maximum(
        jnp.dot(x.astype(jnp.bfloat16), w1.astype(jnp.bfloat16),
                preferred_element_type=jnp.float32) + b1, 0.0)
    ref_bf16 = jnp.dot(h_ref.astype(jnp.bfloat16), w2.astype(jnp.bfloat16),
                       preferred_element_type=jnp.float32) + b2
    assert jnp.allclose(y, ref_bf16, atol=1e-3, rtol=1e-3), "mismatch vs bf16 reference"

    # Full-f32 PyTorch-semantics reference (loose check: bf16 MXU operands).
    ref_f32 = jnp.maximum(x @ w1 + b1, 0.0) @ w2 + b2
    assert jnp.allclose(y, ref_f32, atol=5e-2, rtol=5e-2), "mismatch vs f32 reference"

    # Ragged batch (grid of 2 with a partial last tile) and single-state paths.
    yr = linear_qnet_forward(x[:100], params)
    jax.block_until_ready(yr)
    assert yr.shape == (100, OUT)
    assert jnp.allclose(yr, y[:100], atol=1e-5, rtol=1e-5), "ragged-batch mismatch"

    y1 = linear_qnet_forward(x[0], params)
    jax.block_until_ready(y1)
    assert y1.shape == (OUT,)
    assert jnp.allclose(y1, y[0], atol=1e-5, rtol=1e-5), "single-state mismatch"

    print("KERNEL_OK")
</pallas_src>

<mosaic_0001>
module attributes {stable_mosaic.version = 11 : i64} {
  func.func @_mlp_kernel(%arg0: i32, %arg1: memref<128x16xf32, #tpu.memory_space<vmem>>, %arg2: memref<16x32xbf16, #tpu.memory_space<vmem>>, %arg3: memref<1x32xf32, #tpu.memory_space<vmem>>, %arg4: memref<32x4xbf16, #tpu.memory_space<vmem>>, %arg5: memref<1x4xf32, #tpu.memory_space<vmem>>, %arg6: memref<128x4xf32, #tpu.memory_space<vmem>>) attributes {dimension_semantics = [#tpu.dimension_semantics<parallel>], iteration_bounds = array<i64: 2>, scalar_prefetch = 0 : i64, scratch_operands = 0 : i64, tpu.core_type = #tpu.core_type<tc>, window_params = [{transform_indices = @transform_0, window_bounds = array<i64: 128, 16>}, {pipeline_mode = #tpu.pipeline_mode<synchronous>, transform_indices = @transform_1, window_bounds = array<i64: 16, 32>}, {pipeline_mode = #tpu.pipeline_mode<synchronous>, transform_indices = @transform_2, window_bounds = array<i64: 1, 32>}, {pipeline_mode = #tpu.pipeline_mode<synchronous>, transform_indices = @transform_3, window_bounds = array<i64: 32, 4>}, {pipeline_mode = #tpu.pipeline_mode<synchronous>, transform_indices = @transform_4, window_bounds = array<i64: 1, 4>}, {transform_indices = @transform_5, window_bounds = array<i64: 128, 4>}]} {
    %c0 = arith.constant 0 : index
    %c0_0 = arith.constant 0 : index
    %0 = vector.load %arg1[%c0, %c0_0] : memref<128x16xf32, #tpu.memory_space<vmem>>, vector<128x16xf32>
    %1 = arith.truncf %0 : vector<128x16xf32> to vector<128x16xbf16>
    %c0_1 = arith.constant 0 : index
    %c0_2 = arith.constant 0 : index
    %2 = vector.load %arg2[%c0_1, %c0_2] : memref<16x32xbf16, #tpu.memory_space<vmem>>, vector<16x32xbf16>
    %cst = arith.constant dense<0.000000e+00> : vector<128x32xf32>
    %3 = tpu.matmul %1, %2, %cst {dimension_numbers = #tpu.dot_dimension_numbers<[1], [0], [0], [1], [0, 0, 1, 1], [], []>} : vector<128x16xbf16>, vector<16x32xbf16>, vector<128x32xf32> -> vector<128x32xf32>
    %c0_3 = arith.constant 0 : index
    %c0_4 = arith.constant 0 : index
    %4 = vector.load %arg3[%c0_3, %c0_4] : memref<1x32xf32, #tpu.memory_space<vmem>>, vector<1x32xf32>
    %5 = vector.broadcast %4 : vector<1x32xf32> to vector<128x32xf32>
    %6 = arith.addf %3, %5 : vector<128x32xf32>
    %cst_5 = arith.constant 0.000000e+00 : f32
    %7 = vector.broadcast %cst_5 : f32 to vector<128x32xf32>
    %8 = arith.maximumf %6, %7 : vector<128x32xf32>
    %9 = arith.truncf %8 : vector<128x32xf32> to vector<128x32xbf16>
    %c0_6 = arith.constant 0 : index
    %c0_7 = arith.constant 0 : index
    %10 = vector.load %arg4[%c0_6, %c0_7] : memref<32x4xbf16, #tpu.memory_space<vmem>>, vector<32x4xbf16>
    %cst_8 = arith.constant dense<0.000000e+00> : vector<128x4xf32>
    %11 = tpu.matmul %9, %10, %cst_8 {dimension_numbers = #tpu.dot_dimension_numbers<[1], [0], [0], [1], [0, 0, 1, 1], [], []>} : vector<128x32xbf16>, vector<32x4xbf16>, vector<128x4xf32> -> vector<128x4xf32>
    %c0_9 = arith.constant 0 : index
    %c0_10 = arith.constant 0 : index
    %12 = vector.load %arg5[%c0_9, %c0_10] : memref<1x4xf32, #tpu.memory_space<vmem>>, vector<1x4xf32>
    %13 = vector.broadcast %12 : vector<1x4xf32> to vector<128x4xf32>
    %14 = arith.addf %11, %13 : vector<128x4xf32>
    %c0_11 = arith.constant 0 : index
    %c0_12 = arith.constant 0 : index
    %15 = vector.load %arg6[%c0_11, %c0_12] : memref<128x4xf32, #tpu.memory_space<vmem>>, vector<128x4xf32>
    tpu.vector_store %arg6[%c0_11, %c0_12], %14 {strides = array<i32>} : memref<128x4xf32, #tpu.memory_space<vmem>>, vector<128x4xf32>,
    return
  }
  func.func @transform_0(%arg0: i32) -> (i32, i32) {
    %c0_i32 = arith.constant 0 : i32
    %c0_i32_0 = arith.constant 0 : i32
    return %arg0, %c0_i32 : i32, i32
  }
  func.func @transform_1(%arg0: i32) -> (i32, i32) {
    %c0_i32 = arith.constant 0 : i32
    %c0_i32_0 = arith.constant 0 : i32
    %c0_i32_1 = arith.constant 0 : i32
    return %c0_i32, %c0_i32_0 : i32, i32
  }
  func.func @transform_2(%arg0: i32) -> (i32, i32) {
    %c0_i32 = arith.constant 0 : i32
    %c0_i32_0 = arith.constant 0 : i32
    %c0_i32_1 = arith.constant 0 : i32
    return %c0_i32, %c0_i32_0 : i32, i32
  }
  func.func @transform_3(%arg0: i32) -> (i32, i32) {
    %c0_i32 = arith.constant 0 : i32
    %c0_i32_0 = arith.constant 0 : i32
    %c0_i32_1 = arith.constant 0 : i32
    return %c0_i32, %c0_i32_0 : i32, i32
  }
  func.func @transform_4(%arg0: i32) -> (i32, i32) {
    %c0_i32 = arith.constant 0 : i32
    %c0_i32_0 = arith.constant 0 : i32
    %c0_i32_1 = arith.constant 0 : i32
    return %c0_i32, %c0_i32_0 : i32, i32
  }
  func.func @transform_5(%arg0: i32) -> (i32, i32) {
    %c0_i32 = arith.constant 0 : i32
    %c0_i32_0 = arith.constant 0 : i32
    return %arg0, %c0_i32 : i32, i32
  }
}

</mosaic_0001>

<llo_original>
// kernel: tpu_custom_call.1
$region0: #{tpu_custom_call.1}
  #allocation0 [shape = 'u32[]', space=smem, size = 0x4, offset = 0x4, fixed_abs, tag = 'smem constant byte address 0x4 - core index']
  #allocation1 [shape = 'u32[144,128]{1,0:T(1,128)}', space=vmem, size = 0x12000, scoped, tag = 'internal scratch']
  %s0 = inlined_call_operand.vmem [shape: f32[256,16], index: 0, kind: input, shape index: {}]
  %s1 = inlined_call_operand.vmem [shape: bf16[16,32], index: 1, kind: input, shape index: {}]
  %s2 = inlined_call_operand.vmem [shape: f32[1,32], index: 2, kind: input, shape index: {}]
  %s3 = inlined_call_operand.vmem [shape: bf16[32,4], index: 3, kind: input, shape index: {}]
  %s4 = inlined_call_operand.vmem [shape: f32[1,4], index: 4, kind: input, shape index: {}]
  %s5 = inlined_call_operand.vmem [shape: f32[256,4], index: 5, kind: output, shape index: {}]
  %s6 = sld [smem:[#allocation0]]
  $region53: #{tpu_custom_call.1} parent=0
    _
  %s8 = ssub.s32 1, %s6
  %s9 = scalar_select 0, %s8, %s6
  loop: start=0, step=1, limit=4
  $region2: #{tpu_custom_call.1} parent=0 // loop_pre_header
    _
  $region3: #{tpu_custom_call.1} parent=0 // loop_header
    %s11 = sphi 0, %s15
    %p12 = scmp.ge.s32.totalorder %s11, 4
    %s21 = sphi 0, %s23
    %s24 = sphi 0, %s21
    %s25 = sphi 0, %s24
    %s41 = sphi 0, %s25
    %s45 = sphi 0, %s45
    %s47 = sphi 0, %s45
    %s48 = sphi 0, %s47
    %s62 = sphi 0, %s48
    %s66 = sphi 0, %s66
    %s68 = sphi 0, %s66
    %s69 = sphi 0, %s68
    %s83 = sphi 0, %s69
    %s87 = sphi 0, %s87
    %s89 = sphi 0, %s87
    %s90 = sphi 0, %s89
    %s104 = sphi 0, %s90
    %s108 = sphi 0, %s108
    %s110 = sphi 0, %s108
    %s111 = sphi 0, %s110
    %s125 = sphi 0, %s111
    %s131 = sphi 0, %s133
    %s134 = sphi 0, %s131
    %s135 = sphi 0, %s134
    %s151 = sphi 0, %s135
  $region4: #{tpu_custom_call.1} parent=0 // loop_header_branch
    %14 = sbr.rel (%p12) target = $region8
  $region5: #{tpu_custom_call.1} parent=0 // loop_body
    %s16 = ssub.s32 %s11, 1
    %s17 = ssub.s32 %s11, 2
    %s18 = sadd.s32 %s11, 1
    %s19 = ssub.s32 %s11, %s18
    %p20 = scmp.eq.s32.totalorder %s19, 0
    %s22 = sadd.s32 %s21, 1
    %s23 = scalar_select %p20, %s21, %s22
    %p26 = pneg %p20
    %p27 = scmp.eq.s32.totalorder %s11, 1
    %p28 = por %p26, %p27
    %p29 = scmp.ne.s32.totalorder %s21, %s24
    %p30 = scmp.eq.s32.totalorder %s11, 0
    %p31 = por %p29, %p30
    %p32 = scmp.ne.s32.totalorder %s21, %s24
    %p33 = scmp.eq.s32.totalorder %s16, 1
    %p34 = por %p32, %p33
    %p35 = scmp.ne.s32.totalorder %s24, %s25
    %p36 = scmp.eq.s32.totalorder %s16, 0
    %p37 = por %p35, %p36
    %p38 = scmp.ne.s32.totalorder %s24, %s25
    %p39 = scmp.eq.s32.totalorder %s17, 1
    %p40 = por %p38, %p39
    %p42 = scmp.ne.s32.totalorder %s25, %s41
    %p43 = scmp.eq.s32.totalorder %s17, 0
    %p44 = por %p42, %p43
    %s46 = sadd.s32 %s45, 1
    %p49 = scmp.eq.s32.totalorder %s11, 1
    %p50 = scmp.ne.s32.totalorder %s45, %s47
    %p51 = scmp.eq.s32.totalorder %s11, 0
    %p52 = por %p50, %p51
    %p53 = scmp.ne.s32.totalorder %s45, %s47
    %p54 = scmp.eq.s32.totalorder %s16, 1
    %p55 = por %p53, %p54
    %p56 = scmp.ne.s32.totalorder %s47, %s48
    %p57 = scmp.eq.s32.totalorder %s16, 0
    %p58 = por %p56, %p57
    %p59 = scmp.ne.s32.totalorder %s47, %s48
    %p60 = scmp.eq.s32.totalorder %s17, 1
    %p61 = por %p59, %p60
    %p63 = scmp.ne.s32.totalorder %s48, %s62
    %p64 = scmp.eq.s32.totalorder %s17, 0
    %p65 = por %p63, %p64
    %s67 = sadd.s32 %s66, 1
    %p70 = scmp.eq.s32.totalorder %s11, 1
    %p71 = scmp.ne.s32.totalorder %s66, %s68
    %p72 = scmp.eq.s32.totalorder %s11, 0
    %p73 = por %p71, %p72
    %p74 = scmp.ne.s32.totalorder %s66, %s68
    %p75 = scmp.eq.s32.totalorder %s16, 1
    %p76 = por %p74, %p75
    %p77 = scmp.ne.s32.totalorder %s68, %s69
    %p78 = scmp.eq.s32.totalorder %s16, 0
    %p79 = por %p77, %p78
    %p80 = scmp.ne.s32.totalorder %s68, %s69
    %p81 = scmp.eq.s32.totalorder %s17, 1
    %p82 = por %p80, %p81
    %p84 = scmp.ne.s32.totalorder %s69, %s83
    %p85 = scmp.eq.s32.totalorder %s17, 0
    %p86 = por %p84, %p85
    %s88 = sadd.s32 %s87, 1
    %p91 = scmp.eq.s32.totalorder %s11, 1
    %p92 = scmp.ne.s32.totalorder %s87, %s89
    %p93 = scmp.eq.s32.totalorder %s11, 0
    %p94 = por %p92, %p93
    %p95 = scmp.ne.s32.totalorder %s87, %s89
    %p96 = scmp.eq.s32.totalorder %s16, 1
    %p97 = por %p95, %p96
    %p98 = scmp.ne.s32.totalorder %s89, %s90
    %p99 = scmp.eq.s32.totalorder %s16, 0
    %p100 = por %p98, %p99
    %p101 = scmp.ne.s32.totalorder %s89, %s90
    %p102 = scmp.eq.s32.totalorder %s17, 1
    %p103 = por %p101, %p102
    %p105 = scmp.ne.s32.totalorder %s90, %s104
    %p106 = scmp.eq.s32.totalorder %s17, 0
    %p107 = por %p105, %p106
    %s109 = sadd.s32 %s108, 1
    %p112 = scmp.eq.s32.totalorder %s11, 1
    %p113 = scmp.ne.s32.totalorder %s108, %s110
    %p114 = scmp.eq.s32.totalorder %s11, 0
    %p115 = por %p113, %p114
    %p116 = scmp.ne.s32.totalorder %s108, %s110
    %p117 = scmp.eq.s32.totalorder %s16, 1
    %p118 = por %p116, %p117
    %p119 = scmp.ne.s32.totalorder %s110, %s111
    %p120 = scmp.eq.s32.totalorder %s16, 0
    %p121 = por %p119, %p120
    %p122 = scmp.ne.s32.totalorder %s110, %s111
    %p123 = scmp.eq.s32.totalorder %s17, 1
    %p124 = por %p122, %p123
    %p126 = scmp.ne.s32.totalorder %s111, %s125
    %p127 = scmp.eq.s32.totalorder %s17, 0
    %p128 = por %p126, %p127
    %s129 = ssub.s32 %s11, %s18
    %p130 = scmp.eq.s32.totalorder %s129, 0
    %s132 = sadd.s32 %s131, 1
    %s133 = scalar_select %p130, %s131, %s132
    %p136 = pneg %p130
    %p137 = scmp.eq.s32.totalorder %s11, 1
    %p138 = por %p136, %p137
    %p139 = scmp.ne.s32.totalorder %s131, %s134
    %p140 = scmp.eq.s32.totalorder %s11, 0
    %p141 = por %p139, %p140
    %p142 = scmp.ne.s32.totalorder %s131, %s134
    %p143 = scmp.eq.s32.totalorder %s16, 1
    %p144 = por %p142, %p143
    %p145 = scmp.ne.s32.totalorder %s134, %s135
    %p146 = scmp.eq.s32.totalorder %s16, 0
    %p147 = por %p145, %p146
    %p148 = scmp.ne.s32.totalorder %s134, %s135
    %p149 = scmp.eq.s32.totalorder %s17, 1
    %p150 = por %p148, %p149
    %p152 = scmp.ne.s32.totalorder %s135, %s151
    %p153 = scmp.eq.s32.totalorder %s17, 0
    %p154 = por %p152, %p153
    %p155 = scmp.le.s32.totalorder 1, %s11
    %p156 = scmp.lt.s32.totalorder %s11, 3
    %p157 = pnand %p155, %p156
    %p158 = pneg %p157
    // Predicated region
    $region9: #{tpu_custom_call.1} parent=5 // pred_check
      _
    $region10: #{tpu_custom_call.1} parent=5 // pred_check_branch
      %160 = sbr.rel (%p157) target = $region12
    $region11: #{tpu_custom_call.1} parent=5 // pred_region
      %s161 = ssub.s32 %s11, 1
      // Predicated region
      $region13: #{tpu_custom_call.1} parent=11 // pred_check
        %p162 = pneg %p58
      $region14: #{tpu_custom_call.1} parent=11 // pred_check_branch
        %164 = sbr.rel (%p162) target = $region16
      $region15: #{tpu_custom_call.1} parent=11 // pred_region
        _
      $region16: #{tpu_custom_call.1} parent=11 // pred_fallthru
        _
      // Predicated region
      $region17: #{tpu_custom_call.1} parent=11 // pred_check
        %p165 = pneg %p79
      $region18: #{tpu_custom_call.1} parent=11 // pred_check_branch
        %167 = sbr.rel (%p165) target = $region20
      $region19: #{tpu_custom_call.1} parent=11 // pred_region
        _
      $region20: #{tpu_custom_call.1} parent=11 // pred_fallthru
        _
      // Predicated region
      $region21: #{tpu_custom_call.1} parent=11 // pred_check
        %p168 = pneg %p100
      $region22: #{tpu_custom_call.1} parent=11 // pred_check_branch
        %170 = sbr.rel (%p168) target = $region24
      $region23: #{tpu_custom_call.1} parent=11 // pred_region
        _
      $region24: #{tpu_custom_call.1} parent=11 // pred_fallthru
        _
      // Predicated region
      $region25: #{tpu_custom_call.1} parent=11 // pred_check
        %p171 = pneg %p121
      $region26: #{tpu_custom_call.1} parent=11 // pred_check_branch
        %173 = sbr.rel (%p171) target = $region28
      $region27: #{tpu_custom_call.1} parent=11 // pred_region
        _
      $region28: #{tpu_custom_call.1} parent=11 // pred_fallthru
        _
    $region12: #{tpu_custom_call.1} parent=5 // pred_fallthru
      _
    %p174 = scmp.lt.s32.totalorder %s11, 2
    // Predicated region
    $region29: #{tpu_custom_call.1} parent=5 // pred_check
      %p175 = pneg %p174
    $region30: #{tpu_custom_call.1} parent=5 // pred_check_branch
      %177 = sbr.rel (%p175) target = $region32
    $region31: #{tpu_custom_call.1} parent=5 // pred_region
      // Predicated region
      $region33: #{tpu_custom_call.1} parent=31 // pred_check
        %p178 = pneg %p31
      $region34: #{tpu_custom_call.1} parent=31 // pred_check_branch
        %180 = sbr.rel (%p178) target = $region36
      $region35: #{tpu_custom_call.1} parent=31 // pred_region
        %s181 = smul.u32 16, %s11
        %p182 = scmp.lt.s32.totalorder %s181, 31
        %s183 = scalar_select %p182, %s181, 31
        %s184 = smul.addr %s183, 8
        %s185 = scalar_lea.vmem %s0, %s184
        %s186 = smul.u32 16, %s11
      $region36: #{tpu_custom_call.1} parent=31 // pred_fallthru
        _
    $region32: #{tpu_custom_call.1} parent=5 // pred_fallthru
      _
    %p187 = scmp.le.s32.totalorder 1, %s11
    %p188 = scmp.lt.s32.totalorder %s11, 3
    %p189 = pnand %p187, %p188
    %p190 = pneg %p189
    // Predicated region
    $region37: #{tpu_custom_call.1} parent=5 // pred_check
      _
    $region38: #{tpu_custom_call.1} parent=5 // pred_check_branch
      %192 = sbr.rel (%p189) target = $region40
    $region39: #{tpu_custom_call.1} parent=5 // pred_region
      %s193 = ssub.s32 %s11, 1
      %s194 = smul.u32 16, %s16
      %p195 = scmp.lt.s32.totalorder %s194, 31
      %s196 = scalar_select %p195, %s194, 31
      %s197 = smul.addr %s196, 8
      %s198 = scalar_lea.vmem %s0, %s197
      %p199 = pneg %p37
      %p200 = pneg %p34
      %p201 = pneg %p58
      %p202 = pneg %p55
      %p203 = pneg %p79
      %p204 = pneg %p76
      %p205 = pneg %p100
      %p206 = pneg %p97
      %p207 = pneg %p121
      %p208 = pneg %p118
      %p209 = pneg %p147
      %p210 = pneg %p144
      %s211 = smul.u32 16, %s16
      %p212 = scmp.lt.s32.totalorder %s211, 31
      %s213 = scalar_select %p212, %s211, 31
      %s214 = smul.addr %s213, 8
      %s215 = scalar_lea.vmem %s5, %s214
      %s216 = smul.u32 16, %s16
      %p217 = scmp.lt.s32.totalorder %s216, 31
      %s218 = scalar_select %p217, %s216, 31
      %s219 = smul.addr %s218, 8
      %s220 = scalar_lea.vmem %s0, %s219
      %s221 = smul.u32 16, %s16
      %s222 = smul.u32 16, %s16
      %p223 = scmp.lt.s32.totalorder %s222, 31
      %s224 = scalar_select %p223, %s222, 31
      %s225 = smul.addr %s224, 8
      %s226 = scalar_lea.vmem %s5, %s225
      %s227 = smul.u32 16, %s16
      %v229 = vld [vmem:[%s220] sm:$0xff]
      %v230 = vld [vmem:[%s220 + $0x8] sm:$0xff]
      %v231 = vld [vmem:[%s220 + $0x10] sm:$0xff]
      %v232 = vld [vmem:[%s220 + $0x18] sm:$0xff]
      %v233 = vld [vmem:[%s220 + $0x20] sm:$0xff]
      %v234 = vld [vmem:[%s220 + $0x28] sm:$0xff]
      %v235 = vld [vmem:[%s220 + $0x30] sm:$0xff]
      %v236 = vld [vmem:[%s220 + $0x38] sm:$0xff]
      %v237 = vld [vmem:[%s220 + $0x40] sm:$0xff]
      %v238 = vld [vmem:[%s220 + $0x48] sm:$0xff]
      %v239 = vld [vmem:[%s220 + $0x50] sm:$0xff]
      %v240 = vld [vmem:[%s220 + $0x58] sm:$0xff]
      %v241 = vld [vmem:[%s220 + $0x60] sm:$0xff]
      %v242 = vld [vmem:[%s220 + $0x68] sm:$0xff]
      %v243 = vld [vmem:[%s220 + $0x70] sm:$0xff]
      %v244 = vld [vmem:[%s220 + $0x78] sm:$0xff]
      %v245 = vpack.c.bf16 %v230, %v229
      %v246 = vpack.c.bf16 %v232, %v231
      %v247 = vpack.c.bf16 %v234, %v233
      %v248 = vpack.c.bf16 %v236, %v235
      %v249 = vpack.c.bf16 %v238, %v237
      %v250 = vpack.c.bf16 %v240, %v239
      %v251 = vpack.c.bf16 %v242, %v241
      %v252 = vpack.c.bf16 %v244, %v243
      %v253 = vld [vmem:[%s1] sm:$0xf]
      %v254 = vld [vmem:[%s1 + $0x4] sm:$0xf]
      %v255 = vld [vmem:[%s2] sm:$0x1]
      %v257 = vlaneseq
      %v258 = vshrl.u32 %v257, 7
      %v259 = vsub.s32 0, %v258
      %v260 = vrot.slane %v255, %v259
      %v264 = vunpack.c.l.b16 %v253
      %v265 = vunpack.c.l.b16 %v254
      %v266 = vpack.c.b16 %v265, %v264
      %vm268 = vcmask 130048
      %v270 = vsel %vm268, %v245, 0
      %v273 = vsel %vm268, %v246, 0
      %v276 = vsel %vm268, %v247, 0
      %v279 = vsel %vm268, %v248, 0
      %v282 = vsel %vm268, %v249, 0
      %v285 = vsel %vm268, %v250, 0
      %v288 = vsel %vm268, %v251, 0
      %v291 = vsel %vm268, %v252, 0
      %293 = vmatprep.subr.bf16.mxu0 0
      %294 = vmatpush1.bf16.msra.mxu0 %v266
      %295 = vmatprep.subr.bf16.mxu0 0
      %296 = vmatpush1.bf16.msra.mxu0 0
      %297 = vmatprep.subr.bf16.mxu0 0
      %298 = vmatpush1.bf16.msra.mxu0 0
      %299 = vmatprep.subr.bf16.mxu0 0
      %300 = vmatpush1.bf16.msra.mxu0 0
      %301 = vmatprep.subr.bf16.mxu0 0
      %302 = vmatpush1.bf16.msra.mxu0 0
      %303 = vmatprep.subr.bf16.mxu0 0
      %304 = vmatpush1.bf16.msra.mxu0 0
      %305 = vmatprep.subr.bf16.mxu0 0
      %306 = vmatpush1.bf16.msra.mxu0 0
      %307 = vmatprep.subr.bf16.mxu0 0
      %308 = vmatpush1.bf16.msra.mxu0 0
      %309 = vmatprep.subr.bf16.mxu0 0
      %310 = vmatpush1.bf16.msra.mxu0 0
      %311 = vmatprep.subr.bf16.mxu0 0
      %312 = vmatpush1.bf16.msra.mxu0 0
      %313 = vmatprep.subr.bf16.mxu0 0
      %314 = vmatpush1.bf16.msra.mxu0 0
      %315 = vmatprep.subr.bf16.mxu0 0
      %316 = vmatpush1.bf16.msra.mxu0 0
      %317 = vmatprep.subr.bf16.mxu0 0
      %318 = vmatpush1.bf16.msra.mxu0 0
      %319 = vmatprep.subr.bf16.mxu0 0
      %320 = vmatpush1.bf16.msra.mxu0 0
      %321 = vmatprep.subr.bf16.mxu0 0
      %322 = vmatpush1.bf16.msra.mxu0 0
      %323 = vmatprep.subr.bf16.mxu0 0
      %324 = vmatpush1.bf16.msra.mxu0 0
      %325 = vmatprep.mubr.bf16.mxu0 0
      %326 = vmatmul.mubr.bf16.gmra.mrb[0].mxu0 %v270
      %v327 = vpop.f32.mrb[0].mxu0
      %v328 = vadd.f32 %v260, %v327
      %v329 = vpop.f32.mrb[0].mxu0
      %v330 = vpop.f32.mrb[0].mxu0
      %v331 = vadd.f32 %v260, %v330
      %v332 = vpop.f32.mrb[0].mxu0
      %333 = vmatprep.mubr.bf16.mxu0 0
      %334 = vmatmul.mubr.bf16.gmra.mrb[0].mxu0 %v273
      %v335 = vpop.f32.mrb[0].mxu0
      %v336 = vadd.f32 %v260, %v335
      %v337 = vpop.f32.mrb[0].mxu0
      %v338 = vpop.f32.mrb[0].mxu0
      %v339 = vadd.f32 %v260, %v338
      %v340 = vpop.f32.mrb[0].mxu0
      %341 = vmatprep.mubr.bf16.mxu0 0
      %342 = vmatmul.mubr.bf16.gmra.mrb[0].mxu0 %v276
      %v343 = vpop.f32.mrb[0].mxu0
      %v344 = vadd.f32 %v260, %v343
      %v345 = vpop.f32.mrb[0].mxu0
      %v346 = vpop.f32.mrb[0].mxu0
      %v347 = vadd.f32 %v260, %v346
      %v348 = vpop.f32.mrb[0].mxu0
      %349 = vmatprep.mubr.bf16.mxu0 0
      %350 = vmatmul.mubr.bf16.gmra.mrb[0].mxu0 %v279
      %v351 = vpop.f32.mrb[0].mxu0
      %v352 = vadd.f32 %v260, %v351
      %v353 = vpop.f32.mrb[0].mxu0
      %v354 = vpop.f32.mrb[0].mxu0
      %v355 = vadd.f32 %v260, %v354
      %v356 = vpop.f32.mrb[0].mxu0
      %357 = vmatprep.mubr.bf16.mxu0 0
      %358 = vmatmul.mubr.bf16.gmra.mrb[0].mxu0 %v282
      %v359 = vpop.f32.mrb[0].mxu0
      %v360 = vadd.f32 %v260, %v359
      %v361 = vpop.f32.mrb[0].mxu0
      %v362 = vpop.f32.mrb[0].mxu0
      %v363 = vadd.f32 %v260, %v362
      %v364 = vpop.f32.mrb[0].mxu0
      %365 = vmatprep.mubr.bf16.mxu0 0
      %366 = vmatmul.mubr.bf16.gmra.mrb[0].mxu0 %v285
      %v367 = vpop.f32.mrb[0].mxu0
      %v368 = vadd.f32 %v260, %v367
      %v369 = vpop.f32.mrb[0].mxu0
      %v370 = vpop.f32.mrb[0].mxu0
      %v371 = vadd.f32 %v260, %v370
      %v372 = vpop.f32.mrb[0].mxu0
      %373 = vmatprep.mubr.bf16.mxu0 0
      %374 = vmatmul.mubr.bf16.gmra.mrb[0].mxu0 %v288
      %v375 = vpop.f32.mrb[0].mxu0
      %v376 = vadd.f32 %v260, %v375
      %v377 = vpop.f32.mrb[0].mxu0
      %v378 = vpop.f32.mrb[0].mxu0
      %v379 = vadd.f32 %v260, %v378
      %v380 = vpop.f32.mrb[0].mxu0
      %381 = vmatprep.mubr.bf16.mxu0 0
      %382 = vmatmul.mubr.bf16.gmra.mrb[0].mxu0 %v291
      %v383 = vpop.f32.mrb[0].mxu0
      %v384 = vadd.f32 %v260, %v383
      %v385 = vpop.f32.mrb[0].mxu0
      %v386 = vpop.f32.mrb[0].mxu0
      %v387 = vadd.f32 %v260, %v386
      %v388 = vpop.f32.mrb[0].mxu0
      %389 = vdwg.mxu0
      %v390 = vmax.f32 %v328, 0.0
      %v391 = vmax.f32 %v331, 0.0
      %v392 = vmax.f32 %v336, 0.0
      %v393 = vmax.f32 %v339, 0.0
      %v394 = vmax.f32 %v344, 0.0
      %v395 = vmax.f32 %v347, 0.0
      %v396 = vmax.f32 %v352, 0.0
      %v397 = vmax.f32 %v355, 0.0
      %v398 = vmax.f32 %v360, 0.0
      %v399 = vmax.f32 %v363, 0.0
      %v400 = vmax.f32 %v368, 0.0
      %v401 = vmax.f32 %v371, 0.0
      %v402 = vmax.f32 %v376, 0.0
      %v403 = vmax.f32 %v379, 0.0
      %v404 = vmax.f32 %v384, 0.0
      %v405 = vmax.f32 %v387, 0.0
      %v406 = vpack.c.bf16 %v391, %v390
      %v407 = vpack.c.bf16 %v393, %v392
      %v408 = vpack.c.bf16 %v395, %v394
      %v409 = vpack.c.bf16 %v397, %v396
      %v410 = vpack.c.bf16 %v399, %v398
      %v411 = vpack.c.bf16 %v401, %v400
      %v412 = vpack.c.bf16 %v403, %v402
      %v413 = vpack.c.bf16 %v405, %v404
      %v414 = vld [vmem:[%s3] sm:$0xf]
      %v415 = vld [vmem:[%s3 + $0x4] sm:$0xf]
      %v416 = vld [vmem:[%s3 + $0x8] sm:$0xf]
      %v417 = vld [vmem:[%s3 + $0xc] sm:$0xf]
      %v418 = vld [vmem:[%s4] sm:$0x1]
      %v420 = vlaneseq
      %v421 = vshrl.u32 %v420, 7
      %v422 = vsub.s32 0, %v421
      %v423 = vrot.slane %v418, %v422
      %v429 = vunpack.c.l.b16 %v414
      %v430 = vunpack.c.l.b16 %v415
      %v431 = vunpack.c.l.b16 %v416
      %v432 = vunpack.c.l.b16 %v417
      %v433 = vpack.c.b16 %v430, %v429
      %v434 = vpack.c.b16 %v432, %v431
      %vm437 = vcmask 261120
      %v439 = vsel %vm437, %v406, 0
      %v442 = vsel %vm437, %v407, 0
      %v445 = vsel %vm437, %v408, 0
      %v448 = vsel %vm437, %v409, 0
      %v451 = vsel %vm437, %v410, 0
      %v454 = vsel %vm437, %v411, 0
      %v457 = vsel %vm437, %v412, 0
      %v460 = vsel %vm437, %v413, 0
      %462 = vmatprep.subr.bf16.mxu0 0
      %463 = vmatpush1.bf16.msra.mxu0 %v433
      %464 = vmatprep.subr.bf16.mxu0 0
      %465 = vmatpush1.bf16.msra.mxu0 %v434
      %466 = vmatprep.subr.bf16.mxu0 0
      %467 = vmatpush1.bf16.msra.mxu0 0
      %468 = vmatprep.subr.bf16.mxu0 0
      %469 = vmatpush1.bf16.msra.mxu0 0
      %470 = vmatprep.subr.bf16.mxu0 0
      %471 = vmatpush1.bf16.msra.mxu0 0
      %472 = vmatprep.subr.bf16.mxu0 0
      %473 = vmatpush1.bf16.msra.mxu0 0
      %474 = vmatprep.subr.bf16.mxu0 0
      %475 = vmatpush1.bf16.msra.mxu0 0
      %476 = vmatprep.subr.bf16.mxu0 0
      %477 = vmatpush1.bf16.msra.mxu0 0
      %478 = vmatprep.subr.bf16.mxu0 0
      %479 = vmatpush1.bf16.msra.mxu0 0
      %480 = vmatprep.subr.bf16.mxu0 0
      %481 = vmatpush1.bf16.msra.mxu0 0
      %482 = vmatprep.subr.bf16.mxu0 0
      %483 = vmatpush1.bf16.msra.mxu0 0
      %484 = vmatprep.subr.bf16.mxu0 0
      %485 = vmatpush1.bf16.msra.mxu0 0
      %486 = vmatprep.subr.bf16.mxu0 0
      %487 = vmatpush1.bf16.msra.mxu0 0
      %488 = vmatprep.subr.bf16.mxu0 0
      %489 = vmatpush1.bf16.msra.mxu0 0
      %490 = vmatprep.subr.bf16.mxu0 0
      %491 = vmatpush1.bf16.msra.mxu0 0
      %492 = vmatprep.subr.bf16.mxu0 0
      %493 = vmatpush1.bf16.msra.mxu0 0
      %494 = vmatprep.mubr.bf16.mxu0 0
      %495 = vmatmul.mubr.bf16.gmra.mrb[0].mxu0 %v439
      %v496 = vpop.f32.mrb[0].mxu0
      %v497 = vadd.f32 %v423, %v496
      %v498 = vpop.f32.mrb[0].mxu0
      %v499 = vpop.f32.mrb[0].mxu0
      %v500 = vadd.f32 %v423, %v499
      %v501 = vpop.f32.mrb[0].mxu0
      %502 = vmatprep.mubr.bf16.mxu0 0
      %503 = vmatmul.mubr.bf16.gmra.mrb[0].mxu0 %v442
      %v504 = vpop.f32.mrb[0].mxu0
      %v505 = vadd.f32 %v423, %v504
      %v506 = vpop.f32.mrb[0].mxu0
      %v507 = vpop.f32.mrb[0].mxu0
      %v508 = vadd.f32 %v423, %v507
      %v509 = vpop.f32.mrb[0].mxu0
      %510 = vmatprep.mubr.bf16.mxu0 0
      %511 = vmatmul.mubr.bf16.gmra.mrb[0].mxu0 %v445
      %v512 = vpop.f32.mrb[0].mxu0
      %v513 = vadd.f32 %v423, %v512
      %v514 = vpop.f32.mrb[0].mxu0
      %v515 = vpop.f32.mrb[0].mxu0
      %v516 = vadd.f32 %v423, %v515
      %v517 = vpop.f32.mrb[0].mxu0
      %518 = vmatprep.mubr.bf16.mxu0 0
      %519 = vmatmul.mubr.bf16.gmra.mrb[0].mxu0 %v448
      %v520 = vpop.f32.mrb[0].mxu0
      %v521 = vadd.f32 %v423, %v520
      %v522 = vpop.f32.mrb[0].mxu0
      %v523 = vpop.f32.mrb[0].mxu0
      %v524 = vadd.f32 %v423, %v523
      %v525 = vpop.f32.mrb[0].mxu0
      %526 = vmatprep.mubr.bf16.mxu0 0
      %527 = vmatmul.mubr.bf16.gmra.mrb[0].mxu0 %v451
      %v528 = vpop.f32.mrb[0].mxu0
      %v529 = vadd.f32 %v423, %v528
      %v530 = vpop.f32.mrb[0].mxu0
      %v531 = vpop.f32.mrb[0].mxu0
      %v532 = vadd.f32 %v423, %v531
      %v533 = vpop.f32.mrb[0].mxu0
      %534 = vmatprep.mubr.bf16.mxu0 0
      %535 = vmatmul.mubr.bf16.gmra.mrb[0].mxu0 %v454
      %v536 = vpop.f32.mrb[0].mxu0
      %v537 = vadd.f32 %v423, %v536
      %v538 = vpop.f32.mrb[0].mxu0
      %v539 = vpop.f32.mrb[0].mxu0
      %v540 = vadd.f32 %v423, %v539
      %v541 = vpop.f32.mrb[0].mxu0
      %542 = vmatprep.mubr.bf16.mxu0 0
      %543 = vmatmul.mubr.bf16.gmra.mrb[0].mxu0 %v457
      %v544 = vpop.f32.mrb[0].mxu0
      %v545 = vadd.f32 %v423, %v544
      %v546 = vpop.f32.mrb[0].mxu0
      %v547 = vpop.f32.mrb[0].mxu0
      %v548 = vadd.f32 %v423, %v547
      %v549 = vpop.f32.mrb[0].mxu0
      %550 = vmatprep.mubr.bf16.mxu0 0
      %551 = vmatmul.mubr.bf16.gmra.mrb[0].mxu0 %v460
      %v552 = vpop.f32.mrb[0].mxu0
      %v553 = vadd.f32 %v423, %v552
      %v554 = vpop.f32.mrb[0].mxu0
      %v555 = vpop.f32.mrb[0].mxu0
      %v556 = vadd.f32 %v423, %v555
      %v557 = vpop.f32.mrb[0].mxu0
      %558 = vdwg.mxu0
      %vm559 = vcmask 31744
      %560 = vst.msk [vmem:[%s226] sm:$0xff] %vm559, %v497
      %561 = vst.msk [vmem:[%s226 + $0x8] sm:$0xff] %vm559, %v500
      %562 = vst.msk [vmem:[%s226 + $0x10] sm:$0xff] %vm559, %v505
      %563 = vst.msk [vmem:[%s226 + $0x18] sm:$0xff] %vm559, %v508
      %564 = vst.msk [vmem:[%s226 + $0x20] sm:$0xff] %vm559, %v513
      %565 = vst.msk [vmem:[%s226 + $0x28] sm:$0xff] %vm559, %v516
      %566 = vst.msk [vmem:[%s226 + $0x30] sm:$0xff] %vm559, %v521
      %567 = vst.msk [vmem:[%s226 + $0x38] sm:$0xff] %vm559, %v524
      %568 = vst.msk [vmem:[%s226 + $0x40] sm:$0xff] %vm559, %v529
      %569 = vst.msk [vmem:[%s226 + $0x48] sm:$0xff] %vm559, %v532
      %570 = vst.msk [vmem:[%s226 + $0x50] sm:$0xff] %vm559, %v537
      %571 = vst.msk [vmem:[%s226 + $0x58] sm:$0xff] %vm559, %v540
      %572 = vst.msk [vmem:[%s226 + $0x60] sm:$0xff] %vm559, %v545
      %573 = vst.msk [vmem:[%s226 + $0x68] sm:$0xff] %vm559, %v548
      %574 = vst.msk [vmem:[%s226 + $0x70] sm:$0xff] %vm559, %v553
      %575 = vst.msk [vmem:[%s226 + $0x78] sm:$0xff] %vm559, %v556
      %s576 = smul.u32 16, %s16
      %p577 = scmp.lt.s32.totalorder %s576, 31
      %s578 = scalar_select %p577, %s576, 31
      %s579 = smul.addr %s578, 8
      %s580 = scalar_lea.vmem %s5, %s579
      // Predicated region
      $region41: #{tpu_custom_call.1} parent=39 // pred_check
        %p581 = pneg %p144
      $region42: #{tpu_custom_call.1} parent=39 // pred_check_branch
        %583 = sbr.rel (%p581) target = $region44
      $region43: #{tpu_custom_call.1} parent=39 // pred_region
        %s584 = smul.u32 16, %s16
      $region44: #{tpu_custom_call.1} parent=39 // pred_fallthru
        _
    $region40: #{tpu_custom_call.1} parent=5 // pred_fallthru
      _
    %p585 = scmp.le.s32.totalorder 2, %s11
    // Predicated region
    $region45: #{tpu_custom_call.1} parent=5 // pred_check
      %p586 = pneg %p585
    $region46: #{tpu_custom_call.1} parent=5 // pred_check_branch
      %588 = sbr.rel (%p586) target = $region48
    $region47: #{tpu_custom_call.1} parent=5 // pred_region
      %s589 = ssub.s32 %s11, 2
      // Predicated region
      $region49: #{tpu_custom_call.1} parent=47 // pred_check
        %p590 = pneg %p150
      $region50: #{tpu_custom_call.1} parent=47 // pred_check_branch
        %592 = sbr.rel (%p590) target = $region52
      $region51: #{tpu_custom_call.1} parent=47 // pred_region
        %s593 = smul.u32 16, %s17
        %p594 = scmp.lt.s32.totalorder %s593, 31
        %s595 = scalar_select %p594, %s593, 31
        %s596 = smul.addr %s595, 8
        %s597 = scalar_lea.vmem %s5, %s596
      $region52: #{tpu_custom_call.1} parent=47 // pred_fallthru
        _
    $region48: #{tpu_custom_call.1} parent=5 // pred_fallthru
      _
  $region6: #{tpu_custom_call.1} parent=0 // loop_footer
    %s15 = sadd.s32 1, %s11
  $region7: #{tpu_custom_call.1} parent=0 // loop_footer_branch
    %10 = sbr.rel target = $region3
  $region8: #{tpu_custom_call.1} parent=0 // loop_exit
    _

</llo_original>
